<compile_context>
chip_gen: v6e
topology: v6e:2x2x1
jax: 0.10.0
libtpu: 0.0.40
codegen_flags: <defaults>
</compile_context>

<pallas_src>
import jax
import jax.numpy as jnp
from jax.experimental import pallas as pl
from jax.experimental.pallas import tpu as pltpu

NEG_SLOPE = 0.2


def vae_decoder_kernel(x_ref, w1_ref, b1_ref, w2_ref, b2_ref, w3_ref, b3_ref, out_ref):
    """Fused 3-layer MLP forward for one batch tile (MXU matmuls + VPU activations)."""
    x = x_ref[...]

    # Activations are cast to bf16 at the MXU inputs only (weights arrive pre-cast
    # bf16 from the wrapper); accumulate in f32; bias + LeakyReLU stay f32 on the VPU.
    h = jnp.dot(x.astype(jnp.bfloat16), w1_ref[...],
                preferred_element_type=jnp.float32) + b1_ref[...]
    h = jnp.maximum(h, NEG_SLOPE * h)

    h = jnp.dot(h.astype(jnp.bfloat16), w2_ref[...],
                preferred_element_type=jnp.float32) + b2_ref[...]
    h = jnp.maximum(h, NEG_SLOPE * h)

    y = jnp.dot(h.astype(jnp.bfloat16), w3_ref[...],
                preferred_element_type=jnp.float32) + b3_ref[...]
    out_ref[...] = y.astype(out_ref.dtype)


def _round_up(v, m):
    return ((v + m - 1) // m) * m


def _row_spec(tm, cols, n_buffers=2):
    """Batch-tiled (tm, cols) spec; optionally deeper-than-default pipelining."""
    if n_buffers > 2:
        try:
            return pl.BlockSpec((tm, cols), lambda i: (i, 0),
                                pipeline_mode=pl.Buffered(n_buffers))
        except TypeError:
            # Older JAX without BlockSpec(pipeline_mode=...): fall back to default depth.
            pass
    return pl.BlockSpec((tm, cols), lambda i: (i, 0))


def vae_decoder(x, w1, b1, w2, b2, w3, b3, *, block_m=2048):
    """x: (batch, latent) f32, w*: (in, out) f32, b*: (1, out) f32 -> (batch, output_dim) f32."""
    batch, latent_dim = x.shape
    hidden_dim = w1.shape[1]
    output_dim = w3.shape[1]

    # Pre-cast weights to bf16 once in the wrapper (no per-grid-step casts in-kernel).
    w1b = w1.astype(jnp.bfloat16)
    w2b = w2.astype(jnp.bfloat16)
    w3b = w3.astype(jnp.bfloat16)

    # ---- Batch tiling ---------------------------------------------------------
    # Round the tile UP to a multiple of 8 (never create an extra ~all-padding
    # grid step), then cap it so the grid has >= 2 steps when the batch permits
    # (so the "parallel" axis actually shards across v7x's two TensorCores).
    tm = min(block_m, _round_up(batch, 8))
    tm = max(8, _round_up(tm, 8))
    if batch >= 16 and _round_up(batch, tm) // tm < 2:
        tm = max(8, _round_up((batch + 1) // 2, 8))
    grid_m = (batch + tm - 1) // tm
    padded_batch = grid_m * tm
    xp = jnp.pad(x, ((0, padded_batch - batch), (0, 0))) if padded_batch != batch else x

    const_spec = lambda arr: pl.BlockSpec(arr.shape, lambda i: (0, 0))

    flops = 2 * padded_batch * (latent_dim * hidden_dim
                                + hidden_dim * hidden_dim
                                + hidden_dim * output_dim)
    bytes_accessed = (4 * padded_batch * (latent_dim + output_dim)           # x + out (f32)
                      + 2 * (latent_dim * hidden_dim + hidden_dim * hidden_dim
                             + hidden_dim * output_dim)                      # bf16 weights
                      + 4 * (2 * hidden_dim + output_dim))                   # f32 biases

    out = pl.pallas_call(
        vae_decoder_kernel,
        out_shape=jax.ShapeDtypeStruct((padded_batch, output_dim), x.dtype),
        grid=(grid_m,),
        in_specs=[
            _row_spec(tm, latent_dim),
            const_spec(w1b), const_spec(b1),
            const_spec(w2b), const_spec(b2),
            const_spec(w3b), const_spec(b3),
        ],
        # Out block last dim == full array dim (64): legal without 128-lane padding,
        # so the dominant HBM write stays at its natural width. Triple-buffer the
        # writeback when the grid is long enough to hide it behind the next step.
        out_specs=_row_spec(tm, output_dim, n_buffers=3 if grid_m >= 3 else 2),
        compiler_params=pltpu.CompilerParams(
            dimension_semantics=("parallel",),
        ),
        cost_estimate=pl.CostEstimate(
            flops=flops, transcendentals=0, bytes_accessed=bytes_accessed),
    )(xp, w1b, b1, w2b, b2, w3b, b3)

    return out[:batch] if padded_batch != batch else out


def reference_f32(x, w1, b1, w2, b2, w3, b3):
    leaky = lambda v: jnp.where(v > 0, v, NEG_SLOPE * v)
    h = leaky(x @ w1 + b1)
    h = leaky(h @ w2 + b2)
    return h @ w3 + b3


def reference_bf16_dots(x, w1, b1, w2, b2, w3, b3):
    # Matches the kernel's numerics: bf16 dot inputs, f32 accumulate, f32 elementwise.
    leaky = lambda v: jnp.where(v > 0, v, NEG_SLOPE * v)
    dot = lambda a, b: jnp.dot(a.astype(jnp.bfloat16), b.astype(jnp.bfloat16),
                               preferred_element_type=jnp.float32)
    h = leaky(dot(x, w1) + b1)
    h = leaky(dot(h, w2) + b2)
    return dot(h, w3) + b3


if __name__ == "__main__":
    # Small shapes consistent with the module: latent_dim=8, hidden_dim=32, output_dim=64.
    batch, latent_dim, hidden_dim, output_dim = 64, 8, 32, 64

    key = jax.random.PRNGKey(0)
    kx, k1, k2, k3, kb1, kb2, kb3 = jax.random.split(key, 7)

    x = jax.random.normal(kx, (batch, latent_dim), dtype=jnp.float32)

    # Deterministic synthetic parameters (no checkpoint loading).
    w1 = jax.random.normal(k1, (latent_dim, hidden_dim), dtype=jnp.float32) * 0.1
    b1 = jax.random.normal(kb1, (1, hidden_dim), dtype=jnp.float32) * 0.1
    w2 = jax.random.normal(k2, (hidden_dim, hidden_dim), dtype=jnp.float32) * 0.1
    b2 = jax.random.normal(kb2, (1, hidden_dim), dtype=jnp.float32) * 0.1
    w3 = jax.random.normal(k3, (hidden_dim, output_dim), dtype=jnp.float32) * 0.1
    b3 = jax.random.normal(kb3, (1, output_dim), dtype=jnp.float32) * 0.1

    # Path 1: default big tile; grid>=2 cap kicks in (tm=32, grid=2).
    out_a = jax.block_until_ready(vae_decoder(x, w1, b1, w2, b2, w3, b3))
    # Path 2: small tile; multi-step grid (8 steps) with triple-buffered output.
    out_b = jax.block_until_ready(vae_decoder(x, w1, b1, w2, b2, w3, b3, block_m=8))

    assert out_a.shape == (batch, output_dim)
    assert out_b.shape == (batch, output_dim)

    # Tight check against a numerically-matched (bf16-dot) reference.
    ref_bf16 = reference_bf16_dots(x, w1, b1, w2, b2, w3, b3)
    assert jnp.allclose(out_a, ref_bf16, atol=1e-3, rtol=1e-3), "mismatch vs bf16-dot reference (A)"
    assert jnp.allclose(out_b, ref_bf16, atol=1e-3, rtol=1e-3), "mismatch vs bf16-dot reference (B)"

    # Loose check against the pure-f32 PyTorch-equivalent forward.
    ref_f32 = reference_f32(x, w1, b1, w2, b2, w3, b3)
    assert jnp.allclose(out_a, ref_f32, atol=5e-2, rtol=5e-2), "mismatch vs f32 reference (A)"
    assert jnp.allclose(out_b, ref_f32, atol=5e-2, rtol=5e-2), "mismatch vs f32 reference (B)"

    print("KERNEL_OK")
</pallas_src>

<mosaic_0001>
module attributes {stable_mosaic.version = 11 : i64} {
  func.func @vae_decoder_kernel(%arg0: i32, %arg1: memref<32x8xf32, #tpu.memory_space<vmem>>, %arg2: memref<8x32xbf16, #tpu.memory_space<vmem>>, %arg3: memref<1x32xf32, #tpu.memory_space<vmem>>, %arg4: memref<32x32xbf16, #tpu.memory_space<vmem>>, %arg5: memref<1x32xf32, #tpu.memory_space<vmem>>, %arg6: memref<32x64xbf16, #tpu.memory_space<vmem>>, %arg7: memref<1x64xf32, #tpu.memory_space<vmem>>, %arg8: memref<32x64xf32, #tpu.memory_space<vmem>>) attributes {dimension_semantics = [#tpu.dimension_semantics<parallel>], iteration_bounds = array<i64: 2>, scalar_prefetch = 0 : i64, scratch_operands = 0 : i64, tpu.core_type = #tpu.core_type<tc>, window_params = [{transform_indices = @transform_0, window_bounds = array<i64: 32, 8>}, {pipeline_mode = #tpu.pipeline_mode<synchronous>, transform_indices = @transform_1, window_bounds = array<i64: 8, 32>}, {pipeline_mode = #tpu.pipeline_mode<synchronous>, transform_indices = @transform_2, window_bounds = array<i64: 1, 32>}, {pipeline_mode = #tpu.pipeline_mode<synchronous>, transform_indices = @transform_3, window_bounds = array<i64: 32, 32>}, {pipeline_mode = #tpu.pipeline_mode<synchronous>, transform_indices = @transform_4, window_bounds = array<i64: 1, 32>}, {pipeline_mode = #tpu.pipeline_mode<synchronous>, transform_indices = @transform_5, window_bounds = array<i64: 32, 64>}, {pipeline_mode = #tpu.pipeline_mode<synchronous>, transform_indices = @transform_6, window_bounds = array<i64: 1, 64>}, {transform_indices = @transform_7, window_bounds = array<i64: 32, 64>}]} {
    %c0 = arith.constant 0 : index
    %c0_0 = arith.constant 0 : index
    %0 = vector.load %arg1[%c0, %c0_0] : memref<32x8xf32, #tpu.memory_space<vmem>>, vector<32x8xf32>
    %1 = arith.truncf %0 : vector<32x8xf32> to vector<32x8xbf16>
    %c0_1 = arith.constant 0 : index
    %c0_2 = arith.constant 0 : index
    %2 = vector.load %arg2[%c0_1, %c0_2] : memref<8x32xbf16, #tpu.memory_space<vmem>>, vector<8x32xbf16>
    %cst = arith.constant dense<0.000000e+00> : vector<32x32xf32>
    %3 = tpu.matmul %1, %2, %cst {dimension_numbers = #tpu.dot_dimension_numbers<[1], [0], [0], [1], [0, 0, 1, 1], [], []>} : vector<32x8xbf16>, vector<8x32xbf16>, vector<32x32xf32> -> vector<32x32xf32>
    %c0_3 = arith.constant 0 : index
    %c0_4 = arith.constant 0 : index
    %4 = vector.load %arg3[%c0_3, %c0_4] : memref<1x32xf32, #tpu.memory_space<vmem>>, vector<1x32xf32>
    %5 = vector.broadcast %4 : vector<1x32xf32> to vector<32x32xf32>
    %6 = arith.addf %3, %5 : vector<32x32xf32>
    %cst_5 = arith.constant 2.000000e-01 : f32
    %7 = vector.broadcast %cst_5 : f32 to vector<32x32xf32>
    %8 = arith.mulf %7, %6 : vector<32x32xf32>
    %9 = arith.maximumf %6, %8 : vector<32x32xf32>
    %10 = arith.truncf %9 : vector<32x32xf32> to vector<32x32xbf16>
    %c0_6 = arith.constant 0 : index
    %c0_7 = arith.constant 0 : index
    %11 = vector.load %arg4[%c0_6, %c0_7] : memref<32x32xbf16, #tpu.memory_space<vmem>>, vector<32x32xbf16>
    %cst_8 = arith.constant dense<0.000000e+00> : vector<32x32xf32>
    %12 = tpu.matmul %10, %11, %cst_8 {dimension_numbers = #tpu.dot_dimension_numbers<[1], [0], [0], [1], [0, 0, 1, 1], [], []>} : vector<32x32xbf16>, vector<32x32xbf16>, vector<32x32xf32> -> vector<32x32xf32>
    %c0_9 = arith.constant 0 : index
    %c0_10 = arith.constant 0 : index
    %13 = vector.load %arg5[%c0_9, %c0_10] : memref<1x32xf32, #tpu.memory_space<vmem>>, vector<1x32xf32>
    %14 = vector.broadcast %13 : vector<1x32xf32> to vector<32x32xf32>
    %15 = arith.addf %12, %14 : vector<32x32xf32>
    %cst_11 = arith.constant 2.000000e-01 : f32
    %16 = vector.broadcast %cst_11 : f32 to vector<32x32xf32>
    %17 = arith.mulf %16, %15 : vector<32x32xf32>
    %18 = arith.maximumf %15, %17 : vector<32x32xf32>
    %19 = arith.truncf %18 : vector<32x32xf32> to vector<32x32xbf16>
    %c0_12 = arith.constant 0 : index
    %c0_13 = arith.constant 0 : index
    %20 = vector.load %arg6[%c0_12, %c0_13] : memref<32x64xbf16, #tpu.memory_space<vmem>>, vector<32x64xbf16>
    %cst_14 = arith.constant dense<0.000000e+00> : vector<32x64xf32>
    %21 = tpu.matmul %19, %20, %cst_14 {dimension_numbers = #tpu.dot_dimension_numbers<[1], [0], [0], [1], [0, 0, 1, 1], [], []>} : vector<32x32xbf16>, vector<32x64xbf16>, vector<32x64xf32> -> vector<32x64xf32>
    %c0_15 = arith.constant 0 : index
    %c0_16 = arith.constant 0 : index
    %22 = vector.load %arg7[%c0_15, %c0_16] : memref<1x64xf32, #tpu.memory_space<vmem>>, vector<1x64xf32>
    %23 = vector.broadcast %22 : vector<1x64xf32> to vector<32x64xf32>
    %24 = arith.addf %21, %23 : vector<32x64xf32>
    %c0_17 = arith.constant 0 : index
    %c0_18 = arith.constant 0 : index
    %25 = vector.load %arg8[%c0_17, %c0_18] : memref<32x64xf32, #tpu.memory_space<vmem>>, vector<32x64xf32>
    tpu.vector_store %arg8[%c0_17, %c0_18], %24 {strides = array<i32>} : memref<32x64xf32, #tpu.memory_space<vmem>>, vector<32x64xf32>,
    return
  }
  func.func @transform_0(%arg0: i32) -> (i32, i32) {
    %c0_i32 = arith.constant 0 : i32
    %c0_i32_0 = arith.constant 0 : i32
    return %arg0, %c0_i32 : i32, i32
  }
  func.func @transform_1(%arg0: i32) -> (i32, i32) {
    %c0_i32 = arith.constant 0 : i32
    %c0_i32_0 = arith.constant 0 : i32
    %c0_i32_1 = arith.constant 0 : i32
    return %c0_i32, %c0_i32_0 : i32, i32
  }
  func.func @transform_2(%arg0: i32) -> (i32, i32) {
    %c0_i32 = arith.constant 0 : i32
    %c0_i32_0 = arith.constant 0 : i32
    %c0_i32_1 = arith.constant 0 : i32
    return %c0_i32, %c0_i32_0 : i32, i32
  }
  func.func @transform_3(%arg0: i32) -> (i32, i32) {
    %c0_i32 = arith.constant 0 : i32
    %c0_i32_0 = arith.constant 0 : i32
    %c0_i32_1 = arith.constant 0 : i32
    return %c0_i32, %c0_i32_0 : i32, i32
  }
  func.func @transform_4(%arg0: i32) -> (i32, i32) {
    %c0_i32 = arith.constant 0 : i32
    %c0_i32_0 = arith.constant 0 : i32
    %c0_i32_1 = arith.constant 0 : i32
    return %c0_i32, %c0_i32_0 : i32, i32
  }
  func.func @transform_5(%arg0: i32) -> (i32, i32) {
    %c0_i32 = arith.constant 0 : i32
    %c0_i32_0 = arith.constant 0 : i32
    %c0_i32_1 = arith.constant 0 : i32
    return %c0_i32, %c0_i32_0 : i32, i32
  }
  func.func @transform_6(%arg0: i32) -> (i32, i32) {
    %c0_i32 = arith.constant 0 : i32
    %c0_i32_0 = arith.constant 0 : i32
    %c0_i32_1 = arith.constant 0 : i32
    return %c0_i32, %c0_i32_0 : i32, i32
  }
  func.func @transform_7(%arg0: i32) -> (i32, i32) {
    %c0_i32 = arith.constant 0 : i32
    %c0_i32_0 = arith.constant 0 : i32
    return %arg0, %c0_i32 : i32, i32
  }
}

</mosaic_0001>

<llo_original>
// kernel: tpu_custom_call.1
$region0: #{tpu_custom_call.1}
  #allocation0 [shape = 'u32[]', space=smem, size = 0x4, offset = 0x4, fixed_abs, tag = 'smem constant byte address 0x4 - core index']
  #allocation1 [shape = 'u32[144,128]{1,0:T(1,128)}', space=vmem, size = 0x12000, scoped, tag = 'internal scratch']
  %s0 = inlined_call_operand.vmem [shape: f32[64,8], index: 0, kind: input, shape index: {}]
  %s1 = inlined_call_operand.vmem [shape: bf16[8,32], index: 1, kind: input, shape index: {}]
  %s2 = inlined_call_operand.vmem [shape: f32[1,32], index: 2, kind: input, shape index: {}]
  %s3 = inlined_call_operand.vmem [shape: bf16[32,32], index: 3, kind: input, shape index: {}]
  %s4 = inlined_call_operand.vmem [shape: f32[1,32], index: 4, kind: input, shape index: {}]
  %s5 = inlined_call_operand.vmem [shape: bf16[32,64], index: 5, kind: input, shape index: {}]
  %s6 = inlined_call_operand.vmem [shape: f32[1,64], index: 6, kind: input, shape index: {}]
  %s7 = inlined_call_operand.hbm [shape: f32[64,64], index: 7, kind: output, shape index: {}]
  %s8 = sld [smem:[#allocation0]]
  $region61: #{tpu_custom_call.1} parent=0
    _
  %s10 = ssub.s32 1, %s8
  %s11 = scalar_select 0, %s10, %s8
  $region1: #{tpu_custom_call.1} parent=0
    #allocation2 [shape = 'u8[32768]{0}', space=vmem, size = 0x8000, scoped, tag = 'output window, operand 0']
    #allocation3 [shape = 's32[2]{0}', space=sflag, size = 0x8, scoped, tag = 'scoped memory for tpu_custom_call.1']
    %12 = vsyncpa [#allocation3], 0
    %s13 = scalar_lea.sflag [#allocation3], 1
    %14 = vsyncpa %s13, 0
    loop: start=0, step=1, limit=4
    $region2: #{tpu_custom_call.1} parent=1 // loop_pre_header
      _
    $region3: #{tpu_custom_call.1} parent=1 // loop_header
      %s16 = sphi 0, %s20
      %p17 = scmp.ge.s32.totalorder %s16, 4
      %s26 = sphi 0, %s28
      %s29 = sphi 0, %s26
      %s30 = sphi 0, %s29
      %s46 = sphi 0, %s30
      %s50 = sphi 0, %s50
      %s52 = sphi 0, %s50
      %s53 = sphi 0, %s52
      %s67 = sphi 0, %s53
      %s71 = sphi 0, %s71
      %s73 = sphi 0, %s71
      %s74 = sphi 0, %s73
      %s88 = sphi 0, %s74
      %s92 = sphi 0, %s92
      %s94 = sphi 0, %s92
      %s95 = sphi 0, %s94
      %s109 = sphi 0, %s95
      %s113 = sphi 0, %s113
      %s115 = sphi 0, %s113
      %s116 = sphi 0, %s115
      %s130 = sphi 0, %s116
      %s134 = sphi 0, %s134
      %s136 = sphi 0, %s134
      %s137 = sphi 0, %s136
      %s151 = sphi 0, %s137
      %s155 = sphi 0, %s155
      %s157 = sphi 0, %s155
      %s158 = sphi 0, %s157
      %s172 = sphi 0, %s158
      %s178 = sphi 0, %s180
      %s181 = sphi 0, %s178
      %s182 = sphi 0, %s181
      %s198 = sphi 0, %s182
    $region4: #{tpu_custom_call.1} parent=1 // loop_header_branch
      %19 = sbr.rel (%p17) target = $region8
    $region5: #{tpu_custom_call.1} parent=1 // loop_body
      %s21 = ssub.s32 %s16, 1
      %s22 = ssub.s32 %s16, 2
      %s23 = sadd.s32 %s16, 1
      %s24 = ssub.s32 %s16, %s23
      %p25 = scmp.eq.s32.totalorder %s24, 0
      %s27 = sadd.s32 %s26, 1
      %s28 = scalar_select %p25, %s26, %s27
      %p31 = pneg %p25
      %p32 = scmp.eq.s32.totalorder %s16, 1
      %p33 = por %p31, %p32
      %p34 = scmp.ne.s32.totalorder %s26, %s29
      %p35 = scmp.eq.s32.totalorder %s16, 0
      %p36 = por %p34, %p35
      %p37 = scmp.ne.s32.totalorder %s26, %s29
      %p38 = scmp.eq.s32.totalorder %s21, 1
      %p39 = por %p37, %p38
      %p40 = scmp.ne.s32.totalorder %s29, %s30
      %p41 = scmp.eq.s32.totalorder %s21, 0
      %p42 = por %p40, %p41
      %p43 = scmp.ne.s32.totalorder %s29, %s30
      %p44 = scmp.eq.s32.totalorder %s22, 1
      %p45 = por %p43, %p44
      %p47 = scmp.ne.s32.totalorder %s30, %s46
      %p48 = scmp.eq.s32.totalorder %s22, 0
      %p49 = por %p47, %p48
      %s51 = sadd.s32 %s50, 1
      %p54 = scmp.eq.s32.totalorder %s16, 1
      %p55 = scmp.ne.s32.totalorder %s50, %s52
      %p56 = scmp.eq.s32.totalorder %s16, 0
      %p57 = por %p55, %p56
      %p58 = scmp.ne.s32.totalorder %s50, %s52
      %p59 = scmp.eq.s32.totalorder %s21, 1
      %p60 = por %p58, %p59
      %p61 = scmp.ne.s32.totalorder %s52, %s53
      %p62 = scmp.eq.s32.totalorder %s21, 0
      %p63 = por %p61, %p62
      %p64 = scmp.ne.s32.totalorder %s52, %s53
      %p65 = scmp.eq.s32.totalorder %s22, 1
      %p66 = por %p64, %p65
      %p68 = scmp.ne.s32.totalorder %s53, %s67
      %p69 = scmp.eq.s32.totalorder %s22, 0
      %p70 = por %p68, %p69
      %s72 = sadd.s32 %s71, 1
      %p75 = scmp.eq.s32.totalorder %s16, 1
      %p76 = scmp.ne.s32.totalorder %s71, %s73
      %p77 = scmp.eq.s32.totalorder %s16, 0
      %p78 = por %p76, %p77
      %p79 = scmp.ne.s32.totalorder %s71, %s73
      %p80 = scmp.eq.s32.totalorder %s21, 1
      %p81 = por %p79, %p80
      %p82 = scmp.ne.s32.totalorder %s73, %s74
      %p83 = scmp.eq.s32.totalorder %s21, 0
      %p84 = por %p82, %p83
      %p85 = scmp.ne.s32.totalorder %s73, %s74
      %p86 = scmp.eq.s32.totalorder %s22, 1
      %p87 = por %p85, %p86
      %p89 = scmp.ne.s32.totalorder %s74, %s88
      %p90 = scmp.eq.s32.totalorder %s22, 0
      %p91 = por %p89, %p90
      %s93 = sadd.s32 %s92, 1
      %p96 = scmp.eq.s32.totalorder %s16, 1
      %p97 = scmp.ne.s32.totalorder %s92, %s94
      %p98 = scmp.eq.s32.totalorder %s16, 0
      %p99 = por %p97, %p98
      %p100 = scmp.ne.s32.totalorder %s92, %s94
      %p101 = scmp.eq.s32.totalorder %s21, 1
      %p102 = por %p100, %p101
      %p103 = scmp.ne.s32.totalorder %s94, %s95
      %p104 = scmp.eq.s32.totalorder %s21, 0
      %p105 = por %p103, %p104
      %p106 = scmp.ne.s32.totalorder %s94, %s95
      %p107 = scmp.eq.s32.totalorder %s22, 1
      %p108 = por %p106, %p107
      %p110 = scmp.ne.s32.totalorder %s95, %s109
      %p111 = scmp.eq.s32.totalorder %s22, 0
      %p112 = por %p110, %p111
      %s114 = sadd.s32 %s113, 1
      %p117 = scmp.eq.s32.totalorder %s16, 1
      %p118 = scmp.ne.s32.totalorder %s113, %s115
      %p119 = scmp.eq.s32.totalorder %s16, 0
      %p120 = por %p118, %p119
      %p121 = scmp.ne.s32.totalorder %s113, %s115
      %p122 = scmp.eq.s32.totalorder %s21, 1
      %p123 = por %p121, %p122
      %p124 = scmp.ne.s32.totalorder %s115, %s116
      %p125 = scmp.eq.s32.totalorder %s21, 0
      %p126 = por %p124, %p125
      %p127 = scmp.ne.s32.totalorder %s115, %s116
      %p128 = scmp.eq.s32.totalorder %s22, 1
      %p129 = por %p127, %p128
      %p131 = scmp.ne.s32.totalorder %s116, %s130
      %p132 = scmp.eq.s32.totalorder %s22, 0
      %p133 = por %p131, %p132
      %s135 = sadd.s32 %s134, 1
      %p138 = scmp.eq.s32.totalorder %s16, 1
      %p139 = scmp.ne.s32.totalorder %s134, %s136
      %p140 = scmp.eq.s32.totalorder %s16, 0
      %p141 = por %p139, %p140
      %p142 = scmp.ne.s32.totalorder %s134, %s136
      %p143 = scmp.eq.s32.totalorder %s21, 1
      %p144 = por %p142, %p143
      %p145 = scmp.ne.s32.totalorder %s136, %s137
      %p146 = scmp.eq.s32.totalorder %s21, 0
      %p147 = por %p145, %p146
      %p148 = scmp.ne.s32.totalorder %s136, %s137
      %p149 = scmp.eq.s32.totalorder %s22, 1
      %p150 = por %p148, %p149
      %p152 = scmp.ne.s32.totalorder %s137, %s151
      %p153 = scmp.eq.s32.totalorder %s22, 0
      %p154 = por %p152, %p153
      %s156 = sadd.s32 %s155, 1
      %p159 = scmp.eq.s32.totalorder %s16, 1
      %p160 = scmp.ne.s32.totalorder %s155, %s157
      %p161 = scmp.eq.s32.totalorder %s16, 0
      %p162 = por %p160, %p161
      %p163 = scmp.ne.s32.totalorder %s155, %s157
      %p164 = scmp.eq.s32.totalorder %s21, 1
      %p165 = por %p163, %p164
      %p166 = scmp.ne.s32.totalorder %s157, %s158
      %p167 = scmp.eq.s32.totalorder %s21, 0
      %p168 = por %p166, %p167
      %p169 = scmp.ne.s32.totalorder %s157, %s158
      %p170 = scmp.eq.s32.totalorder %s22, 1
      %p171 = por %p169, %p170
      %p173 = scmp.ne.s32.totalorder %s158, %s172
      %p174 = scmp.eq.s32.totalorder %s22, 0
      %p175 = por %p173, %p174
      %s176 = ssub.s32 %s16, %s23
      %p177 = scmp.eq.s32.totalorder %s176, 0
      %s179 = sadd.s32 %s178, 1
      %s180 = scalar_select %p177, %s178, %s179
      %p183 = pneg %p177
      %p184 = scmp.eq.s32.totalorder %s16, 1
      %p185 = por %p183, %p184
      %p186 = scmp.ne.s32.totalorder %s178, %s181
      %p187 = scmp.eq.s32.totalorder %s16, 0
      %p188 = por %p186, %p187
      %p189 = scmp.ne.s32.totalorder %s178, %s181
      %p190 = scmp.eq.s32.totalorder %s21, 1
      %p191 = por %p189, %p190
      %p192 = scmp.ne.s32.totalorder %s181, %s182
      %p193 = scmp.eq.s32.totalorder %s21, 0
      %p194 = por %p192, %p193
      %p195 = scmp.ne.s32.totalorder %s181, %s182
      %p196 = scmp.eq.s32.totalorder %s22, 1
      %p197 = por %p195, %p196
      %p199 = scmp.ne.s32.totalorder %s182, %s198
      %p200 = scmp.eq.s32.totalorder %s22, 0
      %p201 = por %p199, %p200
      %p202 = scmp.le.s32.totalorder 1, %s16
      %p203 = scmp.lt.s32.totalorder %s16, 3
      %p204 = pnand %p202, %p203
      %p205 = pneg %p204
      // Predicated region
      $region9: #{tpu_custom_call.1} parent=5 // pred_check
        _
      $region10: #{tpu_custom_call.1} parent=5 // pred_check_branch
        %207 = sbr.rel (%p204) target = $region12
      $region11: #{tpu_custom_call.1} parent=5 // pred_region
        %s208 = ssub.s32 %s16, 1
        // Predicated region
        $region13: #{tpu_custom_call.1} parent=11 // pred_check
          %p209 = pneg %p63
        $region14: #{tpu_custom_call.1} parent=11 // pred_check_branch
          %211 = sbr.rel (%p209) target = $region16
        $region15: #{tpu_custom_call.1} parent=11 // pred_region
          _
        $region16: #{tpu_custom_call.1} parent=11 // pred_fallthru
          _
        // Predicated region
        $region17: #{tpu_custom_call.1} parent=11 // pred_check
          %p212 = pneg %p84
        $region18: #{tpu_custom_call.1} parent=11 // pred_check_branch
          %214 = sbr.rel (%p212) target = $region20
        $region19: #{tpu_custom_call.1} parent=11 // pred_region
          _
        $region20: #{tpu_custom_call.1} parent=11 // pred_fallthru
          _
        // Predicated region
        $region21: #{tpu_custom_call.1} parent=11 // pred_check
          %p215 = pneg %p105
        $region22: #{tpu_custom_call.1} parent=11 // pred_check_branch
          %217 = sbr.rel (%p215) target = $region24
        $region23: #{tpu_custom_call.1} parent=11 // pred_region
          _
        $region24: #{tpu_custom_call.1} parent=11 // pred_fallthru
          _
        // Predicated region
        $region25: #{tpu_custom_call.1} parent=11 // pred_check
          %p218 = pneg %p126
        $region26: #{tpu_custom_call.1} parent=11 // pred_check_branch
          %220 = sbr.rel (%p218) target = $region28
        $region27: #{tpu_custom_call.1} parent=11 // pred_region
          _
        $region28: #{tpu_custom_call.1} parent=11 // pred_fallthru
          _
        // Predicated region
        $region29: #{tpu_custom_call.1} parent=11 // pred_check
          %p221 = pneg %p147
        $region30: #{tpu_custom_call.1} parent=11 // pred_check_branch
          %223 = sbr.rel (%p221) target = $region32
        $region31: #{tpu_custom_call.1} parent=11 // pred_region
          _
        $region32: #{tpu_custom_call.1} parent=11 // pred_fallthru
          _
        // Predicated region
        $region33: #{tpu_custom_call.1} parent=11 // pred_check
          %p224 = pneg %p168
        $region34: #{tpu_custom_call.1} parent=11 // pred_check_branch
          %226 = sbr.rel (%p224) target = $region36
        $region35: #{tpu_custom_call.1} parent=11 // pred_region
          _
        $region36: #{tpu_custom_call.1} parent=11 // pred_fallthru
          _
      $region12: #{tpu_custom_call.1} parent=5 // pred_fallthru
        _
      %p227 = scmp.lt.s32.totalorder %s16, 2
      // Predicated region
      $region37: #{tpu_custom_call.1} parent=5 // pred_check
        %p228 = pneg %p227
      $region38: #{tpu_custom_call.1} parent=5 // pred_check_branch
        %230 = sbr.rel (%p228) target = $region40
      $region39: #{tpu_custom_call.1} parent=5 // pred_region
        // Predicated region
        $region41: #{tpu_custom_call.1} parent=39 // pred_check
          %p231 = pneg %p36
        $region42: #{tpu_custom_call.1} parent=39 // pred_check_branch
          %233 = sbr.rel (%p231) target = $region44
        $region43: #{tpu_custom_call.1} parent=39 // pred_region
          %s234 = smul.u32 4, %s16
          %p235 = scmp.lt.s32.totalorder %s234, 7
          %s236 = scalar_select %p235, %s234, 7
          %s237 = smul.addr %s236, 8
          %s238 = scalar_lea.vmem %s0, %s237
          %s239 = smul.u32 4, %s16
        $region44: #{tpu_custom_call.1} parent=39 // pred_fallthru
          _
      $region40: #{tpu_custom_call.1} parent=5 // pred_fallthru
        _
      %p240 = scmp.le.s32.totalorder 1, %s16
      %p241 = scmp.lt.s32.totalorder %s16, 3
      %p242 = pnand %p240, %p241
      %p243 = pneg %p242
      // Predicated region
      $region45: #{tpu_custom_call.1} parent=5 // pred_check
        _
      $region46: #{tpu_custom_call.1} parent=5 // pred_check_branch
        %245 = sbr.rel (%p242) target = $region48
      $region47: #{tpu_custom_call.1} parent=5 // pred_region
        %s246 = ssub.s32 %s16, 1
        %s247 = smul.u32 4, %s21
        %p248 = scmp.lt.s32.totalorder %s247, 7
        %s249 = scalar_select %p248, %s247, 7
        %s250 = smul.addr %s249, 8
        %s251 = scalar_lea.vmem %s0, %s250
        %p252 = pneg %p42
        %p253 = pneg %p39
        %p254 = pneg %p63
        %p255 = pneg %p60
        %p256 = pneg %p84
        %p257 = pneg %p81
        %p258 = pneg %p105
        %p259 = pneg %p102
        %p260 = pneg %p126
        %p261 = pneg %p123
        %p262 = pneg %p147
        %p263 = pneg %p144
        %p264 = pneg %p168
        %p265 = pneg %p165
        %p266 = pneg %p194
        %p267 = pneg %p191
        %s268 = sand.u32 %s181, 1
        %s269 = scalar_lea.sflag [#allocation3], %s268
        %s270 = sand.u32 %s181, 1
        %s271 = smul.addr %s270, 32
        %s272 = scalar_lea.vmem [#allocation2], %s271
        %s273 = smul.u32 4, %s21
        %p274 = scmp.lt.s32.totalorder %s273, 7
        %s275 = scalar_select %p274, %s273, 7
        %s276 = smul.addr %s275, 8
        %s277 = scalar_lea.vmem %s0, %s276
        %s278 = smul.u32 4, %s21
        %s279 = smul.u32 4, %s21
        %v281 = vld [vmem:[%s277] sm:$0xff]
        %v282 = vld [vmem:[%s277 + $0x8] sm:$0xff]
        %v283 = vld [vmem:[%s277 + $0x10] sm:$0xff]
        %v284 = vld [vmem:[%s277 + $0x18] sm:$0xff]
        %v285 = vpack.c.bf16 %v282, %v281
        %v286 = vpack.c.bf16 %v284, %v283
        %v287 = vld [vmem:[%s1] sm:$0xf]
        %v288 = vld [vmem:[%s2] sm:$0x1]
        %v290 = vlaneseq
        %v291 = vshrl.u32 %v290, 7
        %v292 = vsub.s32 0, %v291
        %v293 = vrot.slane %v288, %v292
        %vm295 = vcmask 64512
        %v297 = vsel %vm295, %v285, 0
        %v300 = vsel %vm295, %v286, 0
        %vm302 = vcmask 1043456
        %v304 = vsel %vm302, %v287, 0
        %306 = vmatprep.subr.bf16.mxu0 0
        %307 = vmatpush1.bf16.msra.mxu0 0
        %308 = vmatprep.subr.bf16.mxu0 0
        %309 = vmatpush1.bf16.msra.mxu0 0
        %310 = vmatprep.subr.bf16.mxu0 0
        %311 = vmatpush1.bf16.msra.mxu0 0
        %312 = vmatprep.subr.bf16.mxu0 0
        %313 = vmatpush1.bf16.msra.mxu0 0
        %314 = vmatprep.subr.bf16.mxu0 0
        %315 = vmatpush1.bf16.msra.mxu0 0
        %316 = vmatprep.subr.bf16.mxu0 0
        %317 = vmatpush1.bf16.msra.mxu0 0
        %318 = vmatprep.subr.bf16.mxu0 0
        %319 = vmatpush1.bf16.msra.mxu0 0
        %320 = vmatprep.subr.bf16.mxu0 0
        %321 = vmatpush1.bf16.msra.mxu0 %v304
        %322 = vmatprep.subr.bf16.mxu0 0
        %323 = vmatpush2.bf16.msra.mxu0 0
        %324 = vmatprep.subr.bf16.mxu0 0
        %325 = vmatpush2.bf16.msra.mxu0 0
        %326 = vmatprep.subr.bf16.mxu0 0
        %327 = vmatpush2.bf16.msra.mxu0 0
        %328 = vmatprep.subr.bf16.mxu0 0
        %329 = vmatpush2.bf16.msra.mxu0 0
        %330 = vmatprep.subr.bf16.mxu0 0
        %331 = vmatpush2.bf16.msra.mxu0 0
        %332 = vmatprep.subr.bf16.mxu0 0
        %333 = vmatpush2.bf16.msra.mxu0 0
        %334 = vmatprep.subr.bf16.mxu0 0
        %335 = vmatpush2.bf16.msra.mxu0 0
        %336 = vmatprep.subr.bf16.mxu0 0
        %337 = vmatpush2.bf16.msra.mxu0 0
        %338 = vmatprep.mubr.bf16.mxu0 0
        %339 = vmatmul.mubr.bf16.gmra.mxu0 %v297
        %v340 = vpop.f32.mrf.mxu0
        %v341 = vadd.f32 %v293, %v340
        %v342 = vpop.f32.mrf.mxu0
        %v343 = vpop.f32.mrf.mxu0
        %v344 = vadd.f32 %v293, %v343
        %v345 = vpop.f32.mrf.mxu0
        %346 = vmatprep.mubr.bf16.mxu0 0
        %347 = vmatmul.mubr.bf16.gmra.mxu0 %v300
        %v348 = vpop.f32.mrf.mxu0
        %v349 = vadd.f32 %v293, %v348
        %v350 = vpop.f32.mrf.mxu0
        %v351 = vpop.f32.mrf.mxu0
        %v352 = vadd.f32 %v293, %v351
        %v353 = vpop.f32.mrf.mxu0
        %354 = vdwg.mxu0
        %v355 = vmul.f32 %v341, 0.2
        %v356 = vmul.f32 %v344, 0.2
        %v357 = vmul.f32 %v349, 0.2
        %v358 = vmul.f32 %v352, 0.2
        %v359 = vmax.f32 %v341, %v355
        %v360 = vmax.f32 %v344, %v356
        %v361 = vmax.f32 %v349, %v357
        %v362 = vmax.f32 %v352, %v358
        %v363 = vpack.c.bf16 %v360, %v359
        %v364 = vpack.c.bf16 %v362, %v361
        %v365 = vld [vmem:[%s3] sm:$0xf]
        %v366 = vld [vmem:[%s3 + $0x4] sm:$0xf]
        %v367 = vld [vmem:[%s3 + $0x8] sm:$0xf]
        %v368 = vld [vmem:[%s3 + $0xc] sm:$0xf]
        %v369 = vld [vmem:[%s4] sm:$0x1]
        %v371 = vlaneseq
        %v372 = vshrl.u32 %v371, 7
        %v373 = vsub.s32 0, %v372
        %v374 = vrot.slane %v369, %v373
        %v380 = vunpack.c.l.b16 %v365
        %v381 = vunpack.c.l.b16 %v366
        %v382 = vunpack.c.l.b16 %v367
        %v383 = vunpack.c.l.b16 %v368
        %v384 = vpack.c.b16 %v381, %v380
        %v385 = vpack.c.b16 %v383, %v382
        %vm388 = vcmask 261120
        %v390 = vsel %vm388, %v363, 0
        %v393 = vsel %vm388, %v364, 0
        %395 = vmatprep.subr.bf16.mxu0 0
        %396 = vmatpush1.bf16.msra.mxu0 0
        %397 = vmatprep.subr.bf16.mxu0 0
        %398 = vmatpush1.bf16.msra.mxu0 0
        %399 = vmatprep.subr.bf16.mxu0 0
        %400 = vmatpush1.bf16.msra.mxu0 0
        %401 = vmatprep.subr.bf16.mxu0 0
        %402 = vmatpush1.bf16.msra.mxu0 0
        %403 = vmatprep.subr.bf16.mxu0 0
        %404 = vmatpush1.bf16.msra.mxu0 0
        %405 = vmatprep.subr.bf16.mxu0 0
        %406 = vmatpush1.bf16.msra.mxu0 0
        %407 = vmatprep.subr.bf16.mxu0 0
        %408 = vmatpush1.bf16.msra.mxu0 %v385
        %409 = vmatprep.subr.bf16.mxu0 0
        %410 = vmatpush1.bf16.msra.mxu0 %v384
        %411 = vmatprep.subr.bf16.mxu0 0
        %412 = vmatpush2.bf16.msra.mxu0 0
        %413 = vmatprep.subr.bf16.mxu0 0
        %414 = vmatpush2.bf16.msra.mxu0 0
        %415 = vmatprep.subr.bf16.mxu0 0
        %416 = vmatpush2.bf16.msra.mxu0 0
        %417 = vmatprep.subr.bf16.mxu0 0
        %418 = vmatpush2.bf16.msra.mxu0 0
        %419 = vmatprep.subr.bf16.mxu0 0
        %420 = vmatpush2.bf16.msra.mxu0 0
        %421 = vmatprep.subr.bf16.mxu0 0
        %422 = vmatpush2.bf16.msra.mxu0 0
        %423 = vmatprep.subr.bf16.mxu0 0
        %424 = vmatpush2.bf16.msra.mxu0 0
        %425 = vmatprep.subr.bf16.mxu0 0
        %426 = vmatpush2.bf16.msra.mxu0 0
        %427 = vmatprep.mubr.bf16.mxu0 0
        %428 = vmatmul.mubr.bf16.gmra.mxu0 %v390
        %v429 = vpop.f32.mrf.mxu0
        %v430 = vadd.f32 %v374, %v429
        %v431 = vpop.f32.mrf.mxu0
        %v432 = vpop.f32.mrf.mxu0
        %v433 = vadd.f32 %v374, %v432
        %v434 = vpop.f32.mrf.mxu0
        %435 = vmatprep.mubr.bf16.mxu0 0
        %436 = vmatmul.mubr.bf16.gmra.mxu0 %v393
        %v437 = vpop.f32.mrf.mxu0
        %v438 = vadd.f32 %v374, %v437
        %v439 = vpop.f32.mrf.mxu0
        %v440 = vpop.f32.mrf.mxu0
        %v441 = vadd.f32 %v374, %v440
        %v442 = vpop.f32.mrf.mxu0
        %443 = vdwg.mxu0
        %v444 = vmul.f32 %v430, 0.2
        %v445 = vmul.f32 %v433, 0.2
        %v446 = vmul.f32 %v438, 0.2
        %v447 = vmul.f32 %v441, 0.2
        %v448 = vmax.f32 %v430, %v444
        %v449 = vmax.f32 %v433, %v445
        %v450 = vmax.f32 %v438, %v446
        %v451 = vmax.f32 %v441, %v447
        %v452 = vpack.c.bf16 %v449, %v448
        %v453 = vpack.c.bf16 %v451, %v450
        %v454 = vld [vmem:[%s5] sm:$0xf]
        %v455 = vld [vmem:[%s5 + $0x4] sm:$0xf]
        %v456 = vld [vmem:[%s5 + $0x8] sm:$0xf]
        %v457 = vld [vmem:[%s5 + $0xc] sm:$0xf]
        %v458 = vld [vmem:[%s6] sm:$0x1]
        %v460 = vlaneseq
        %v461 = vshrl.u32 %v460, 7
        %v462 = vsub.s32 0, %v461
        %v463 = vrot.slane %v458, %v462
        %v469 = vunpack.c.l.b16 %v454
        %v470 = vunpack.c.l.b16 %v455
        %v471 = vunpack.c.l.b16 %v456
        %v472 = vunpack.c.l.b16 %v457
        %v473 = vpack.c.b16 %v470, %v469
        %v474 = vpack.c.b16 %v472, %v471
        %v478 = vsel %vm388, %v452, 0
        %v481 = vsel %vm388, %v453, 0
        %483 = vmatprep.subr.bf16.mxu0 0
        %484 = vmatpush1.bf16.msra.mxu0 0
        %485 = vmatprep.subr.bf16.mxu0 0
        %486 = vmatpush1.bf16.msra.mxu0 0
        %487 = vmatprep.subr.bf16.mxu0 0
        %488 = vmatpush1.bf16.msra.mxu0 0
        %489 = vmatprep.subr.bf16.mxu0 0
        %490 = vmatpush1.bf16.msra.mxu0 0
        %491 = vmatprep.subr.bf16.mxu0 0
        %492 = vmatpush1.bf16.msra.mxu0 0
        %493 = vmatprep.subr.bf16.mxu0 0
        %494 = vmatpush1.bf16.msra.mxu0 0
        %495 = vmatprep.subr.bf16.mxu0 0
        %496 = vmatpush1.bf16.msra.mxu0 %v474
        %497 = vmatprep.subr.bf16.mxu0 0
        %498 = vmatpush1.bf16.msra.mxu0 %v473
        %499 = vmatprep.subr.bf16.mxu0 0
        %500 = vmatpush2.bf16.msra.mxu0 0
        %501 = vmatprep.subr.bf16.mxu0 0
        %502 = vmatpush2.bf16.msra.mxu0 0
        %503 = vmatprep.subr.bf16.mxu0 0
        %504 = vmatpush2.bf16.msra.mxu0 0
        %505 = vmatprep.subr.bf16.mxu0 0
        %506 = vmatpush2.bf16.msra.mxu0 0
        %507 = vmatprep.subr.bf16.mxu0 0
        %508 = vmatpush2.bf16.msra.mxu0 0
        %509 = vmatprep.subr.bf16.mxu0 0
        %510 = vmatpush2.bf16.msra.mxu0 0
        %511 = vmatprep.subr.bf16.mxu0 0
        %512 = vmatpush2.bf16.msra.mxu0 0
        %513 = vmatprep.subr.bf16.mxu0 0
        %514 = vmatpush2.bf16.msra.mxu0 0
        %515 = vmatprep.mubr.bf16.mxu0 0
        %516 = vmatmul.mubr.bf16.gmra.mxu0 %v478
        %v517 = vpop.f32.mrf.mxu0
        %v518 = vadd.f32 %v463, %v517
        %v519 = vpop.f32.mrf.mxu0
        %v520 = vpop.f32.mrf.mxu0
        %v521 = vadd.f32 %v463, %v520
        %v522 = vpop.f32.mrf.mxu0
        %523 = vmatprep.mubr.bf16.mxu0 0
        %524 = vmatmul.mubr.bf16.gmra.mxu0 %v481
        %v525 = vpop.f32.mrf.mxu0
        %v526 = vadd.f32 %v463, %v525
        %v527 = vpop.f32.mrf.mxu0
        %v528 = vpop.f32.mrf.mxu0
        %v529 = vadd.f32 %v463, %v528
        %v530 = vpop.f32.mrf.mxu0
        %531 = vdwg.mxu0
        %vm532 = vcmask 523264
        %533 = vst.msk [vmem:[%s272] sm:$0xff] %vm532, %v518
        %534 = vst.msk [vmem:[%s272 + $0x8] sm:$0xff] %vm532, %v521
        %535 = vst.msk [vmem:[%s272 + $0x10] sm:$0xff] %vm532, %v526
        %536 = vst.msk [vmem:[%s272 + $0x18] sm:$0xff] %vm532, %v529
        %s537 = sand.u32 %s181, 1
        %s538 = scalar_lea.sflag [#allocation3], %s537
        %s539 = sand.u32 %s181, 1
        %s540 = smul.addr %s539, 32
        %s541 = scalar_lea.vmem [#allocation2], %s540
        // Predicated region
        $region49: #{tpu_custom_call.1} parent=47 // pred_check
          %p542 = pneg %p191
        $region50: #{tpu_custom_call.1} parent=47 // pred_check_branch
          %544 = sbr.rel (%p542) target = $region52
        $region51: #{tpu_custom_call.1} parent=47 // pred_region
          %s545 = smul.u32 4, %s21
          %s547 = ssub.s32 512, 512
          %548 = vsyncadd %s538, %s547
          %s549 = smul.addr %s545, 128
          %s550 = scalar_lea.hbm %s7, %s549
          %s551 = sshll.u32 %s541, 4
          %s552 = int_to_ptr.vmem [resolvable:$true] %s551
          %557 = dma.vmem_to_hbm [thread:$0]  %s552, 512, %s550, %s538, 128, 128, 8
        $region52: #{tpu_custom_call.1} parent=47 // pred_fallthru
          _
      $region48: #{tpu_custom_call.1} parent=5 // pred_fallthru
        _
      %p558 = scmp.le.s32.totalorder 2, %s16
      // Predicated region
      $region53: #{tpu_custom_call.1} parent=5 // pred_check
        %p559 = pneg %p558
      $region54: #{tpu_custom_call.1} parent=5 // pred_check_branch
        %561 = sbr.rel (%p559) target = $region56
      $region55: #{tpu_custom_call.1} parent=5 // pred_region
        %s562 = ssub.s32 %s16, 2
        // Predicated region
        $region57: #{tpu_custom_call.1} parent=55 // pred_check
          %p563 = pneg %p197
        $region58: #{tpu_custom_call.1} parent=55 // pred_check_branch
          %565 = sbr.rel (%p563) target = $region60
        $region59: #{tpu_custom_call.1} parent=55 // pred_region
          %s566 = sand.u32 %s182, 1
          %s567 = scalar_lea.sflag [#allocation3], %s566
          %s568 = sand.u32 %s182, 1
          %s569 = smul.addr %s568, 32
          %s570 = scalar_lea.vmem [#allocation2], %s569
          %571 = dma.done %s567, 512
        $region60: #{tpu_custom_call.1} parent=55 // pred_fallthru
          _
      $region56: #{tpu_custom_call.1} parent=5 // pred_fallthru
        _
    $region6: #{tpu_custom_call.1} parent=1 // loop_footer
      %s20 = sadd.s32 1, %s16
    $region7: #{tpu_custom_call.1} parent=1 // loop_footer_branch
      %15 = sbr.rel target = $region3
    $region8: #{tpu_custom_call.1} parent=1 // loop_exit
      _
    %572 = vsyncpa [#allocation3], 1
    %s573 = scalar_lea.sflag [#allocation3], 1
    %574 = vsyncpa %s573, 1

</llo_original>
